<compile_context>
chip_gen: v7x
topology: tpu7x:2x2x1
jax: 0.10.0
libtpu: 0.0.40
codegen_flags: <defaults>
</compile_context>

<pallas_src>
import jax
import jax.numpy as jnp
from jax.experimental import pallas as pl
from jax.experimental.pallas import tpu as pltpu


# ---------------------------------------------------------------------------
# Path 1 (primary): single bulk HBM -> HBM DMA, no grid, no VMEM staging.
# ---------------------------------------------------------------------------
def _dma_identity_kernel(x_hbm_ref, o_hbm_ref):
    def body(sem):
        copy = pltpu.make_async_copy(x_hbm_ref, o_hbm_ref, sem)
        copy.start()
        copy.wait()

    pl.run_scoped(body, pltpu.SemaphoreType.DMA(()))


def _forward_dma(x: jax.Array) -> jax.Array:
    return pl.pallas_call(
        _dma_identity_kernel,
        out_shape=jax.ShapeDtypeStruct(x.shape, x.dtype),
        in_specs=[pl.BlockSpec(memory_space=pl.ANY)],
        out_specs=pl.BlockSpec(memory_space=pl.ANY),
    )(x)


# ---------------------------------------------------------------------------
# Path 2 (secondary / fallback): lane-dense, row-tiled VMEM copy.
# ---------------------------------------------------------------------------
def _copy_kernel(x_ref, o_ref):
    o_ref[...] = x_ref[...]


def _max_block_bytes() -> int:
    """Per-operand block budget, per TPU generation (review guidance)."""
    try:
        kind = jax.devices()[0].device_kind.lower()
    except Exception:
        return 2 * 1024 * 1024
    if "v5e" in kind or "v5 lite" in kind or "v5lite" in kind:
        return 2 * 1024 * 1024          # ~3.3 us DMA/step already >> step cost
    return 8 * 1024 * 1024              # v6e / v7x: amortize ~0.35 us step cost


def _sublane_multiple(dtype) -> int:
    """Packed-sublane granularity: 8 for 32-bit, 16 for 16-bit, 32 for 8-bit."""
    bits = jnp.dtype(dtype).itemsize * 8
    if bits >= 32:
        return 8
    if bits == 16:
        return 16
    return 32


def _lane_dense_shape(total: int, natural_cols: int, max_cols: int = 32768):
    """Pick (rows, cols) with cols the largest 128-multiple divisor of total."""
    best = 0
    cols = 128
    limit = min(total, max_cols)
    while cols <= limit:
        if total % cols == 0:
            best = cols
        cols += 128
    if best:
        return total // best, best
    # TODO(synk): no 128-multiple divisor exists; fall back to the natural
    # innermost axis (lane-sparse -> masked vst; correct, perf hazard only).
    natural_cols = max(1, natural_cols)
    return total // natural_cols, natural_cols


def _pick_block_rows(rows: int, cols: int, itemsize: int, sub: int,
                     max_block_bytes: int) -> int:
    """Largest row-tile under the byte budget, preferring a divisor of rows
    (so the final grid step is a full, unmasked block) and keeping the
    second-to-last dim a multiple of the packed sublane count."""
    bytes_per_row = max(1, cols * itemsize)
    max_rows = max(sub, max_block_bytes // bytes_per_row)
    if rows <= max_rows:
        return rows                      # whole array in one block (legal)
    best_div = 0
    r = sub
    while r <= max_rows:
        if rows % r == 0:
            best_div = r
        r += sub
    if best_div >= max(sub, max_rows // 2):
        return best_div                  # full final block, near the budget
    return max(sub, (max_rows // sub) * sub)   # masked tail: perf-only hazard


def discriminator_forward_tiled(x: jax.Array) -> jax.Array:
    """Identity producing a fresh buffer via a pipelined tiled VMEM copy."""
    if x.size == 0:
        return x
    orig_shape = x.shape
    total = int(x.size)
    natural_cols = int(orig_shape[-1]) if x.ndim >= 1 else 1
    rows, cols = _lane_dense_shape(total, natural_cols)
    x2 = x.reshape(rows, cols)           # pure reshape: element order unchanged

    sub = _sublane_multiple(x.dtype)
    block_rows = _pick_block_rows(rows, cols, x.dtype.itemsize, sub,
                                  _max_block_bytes())
    grid = (pl.cdiv(rows, block_rows),)

    # 2 operands x 2 pipeline buffers x block; set the scoped-VMEM limit
    # explicitly so the large-block choice is legal on every generation
    # (capped well under v7x's 64 MiB physical VMEM).
    block_bytes = block_rows * cols * x.dtype.itemsize
    vmem_limit = int(min(48 * 1024 * 1024, max(32 * 1024 * 1024, 5 * block_bytes)))

    # TODO(synk): on v7x, CORE_PARALLEL (or pl.core_map over the 2-TC mesh)
    # would split the row grid across both TensorCores; plain "parallel" vs
    # "arbitrary" makes no measurable difference, so keep it simple here.
    out2 = pl.pallas_call(
        _copy_kernel,
        out_shape=jax.ShapeDtypeStruct((rows, cols), x.dtype),
        grid=grid,
        in_specs=[pl.BlockSpec((block_rows, cols), lambda i: (i, 0))],
        out_specs=pl.BlockSpec((block_rows, cols), lambda i: (i, 0)),
        compiler_params=pltpu.CompilerParams(
            dimension_semantics=("arbitrary",),
            vmem_limit_bytes=vmem_limit,
        ),
    )(x2)
    return out2.reshape(orig_shape)


# ---------------------------------------------------------------------------
# Public wrapper.
# ---------------------------------------------------------------------------
_forward_dma_jit = jax.jit(_forward_dma)
_forward_tiled_jit = jax.jit(discriminator_forward_tiled)


def discriminator_forward(x: jax.Array) -> jax.Array:
    """Identity forward pass of Discriminator (empty nn.Sequential).

    Note: the zero-cost identity is simply `return x` (no kernel at all, and
    no hidden defensive copy).  When a *fresh* output buffer must be produced
    through a kernel boundary, a single bulk HBM->HBM DMA is the cheapest way
    to do it; that is what this wrapper runs.
    """
    if x.size == 0:
        return x
    try:
        return _forward_dma_jit(x)
    except Exception:
        # Fallback (e.g. interpreter backends without manual-DMA discharge):
        # pipelined tiled VMEM copy, identical semantics.
        return _forward_tiled_jit(x)


if __name__ == "__main__":
    key = jax.random.PRNGKey(0)
    # Small NCHW input consistent with a conv-style discriminator input.
    x = jax.random.normal(key, (2, 4, 16, 16), dtype=jnp.float32)

    # Primary path: single HBM->HBM DMA identity.
    y = jax.block_until_ready(discriminator_forward(x))
    assert y.shape == x.shape and y.dtype == x.dtype
    assert bool(jnp.array_equal(y, x))

    # Secondary path: lane-dense tiled VMEM copy.
    y2 = jax.block_until_ready(_forward_tiled_jit(x))
    assert y2.shape == x.shape and y2.dtype == x.dtype
    assert bool(jnp.array_equal(y2, x))

    print("KERNEL_OK")
</pallas_src>

<mosaic_0001>
module attributes {stable_mosaic.version = 11 : i64} {
  func.func @_dma_identity_kernel(%arg0: memref<2x4x16x16xf32, #tpu.memory_space<any>>, %arg1: memref<2x4x16x16xf32, #tpu.memory_space<any>>) attributes {dimension_semantics = [], scalar_prefetch = 0 : i64, scratch_operands = 0 : i64, tpu.core_type = #tpu.core_type<tc>} {
    "tpu.region"() ({
      %0 = tpu.sem_alloc : memref<!tpu.dma_semaphore, #tpu.memory_space<semaphore_mem>>
      tpu.enqueue_dma source(%arg0 : memref<2x4x16x16xf32, #tpu.memory_space<any>>) target(%arg1 : memref<2x4x16x16xf32, #tpu.memory_space<any>>) target_semaphore(%0 : memref<!tpu.dma_semaphore, #tpu.memory_space<semaphore_mem>>)
      tpu.wait_dma2 semaphore(%0 : memref<!tpu.dma_semaphore, #tpu.memory_space<semaphore_mem>>) src(%arg0 : memref<2x4x16x16xf32, #tpu.memory_space<any>>) dst(%arg1 : memref<2x4x16x16xf32, #tpu.memory_space<any>>)
      tpu.yield
    }) : () -> ()
    return
  }
}

module attributes {stable_mosaic.version = 11 : i64} {
  func.func @_copy_kernel(%arg0: i32, %arg1: memref<1x2048xf32, #tpu.memory_space<vmem>>, %arg2: memref<1x2048xf32, #tpu.memory_space<vmem>>) attributes {dimension_semantics = [#tpu.dimension_semantics<arbitrary>], iteration_bounds = array<i64: 1>, scalar_prefetch = 0 : i64, scratch_operands = 0 : i64, tpu.core_type = #tpu.core_type<tc>, window_params = [{transform_indices = @transform_0, window_bounds = array<i64: 1, 2048>}, {transform_indices = @transform_1, window_bounds = array<i64: 1, 2048>}]} {
    %c0 = arith.constant 0 : index
    %c0_0 = arith.constant 0 : index
    %0 = vector.load %arg1[%c0, %c0_0] : memref<1x2048xf32, #tpu.memory_space<vmem>>, vector<1x2048xf32>
    %c0_1 = arith.constant 0 : index
    %c0_2 = arith.constant 0 : index
    %1 = vector.load %arg2[%c0_1, %c0_2] : memref<1x2048xf32, #tpu.memory_space<vmem>>, vector<1x2048xf32>
    tpu.vector_store %arg2[%c0_1, %c0_2], %0 {strides = array<i32>} : memref<1x2048xf32, #tpu.memory_space<vmem>>, vector<1x2048xf32>,
    return
  }
  func.func @transform_0(%arg0: i32) -> (i32, i32) {
    %c0_i32 = arith.constant 0 : i32
    %c0_i32_0 = arith.constant 0 : i32
    return %arg0, %c0_i32 : i32, i32
  }
  func.func @transform_1(%arg0: i32) -> (i32, i32) {
    %c0_i32 = arith.constant 0 : i32
    %c0_i32_0 = arith.constant 0 : i32
    return %arg0, %c0_i32 : i32, i32
  }
}

</mosaic_0001>

<llo_original>
// kernel: _forward_dma.1
$region0: #{_forward_dma.1}
  #allocation0 [shape = 'u32[]', space=smem, size = 0x4, offset = 0x4, fixed_abs, tag = 'smem constant byte address 0x4 - core index']
  #allocation1 [shape = 'u32[144,128]{1,0:T(1,128)}', space=vmem, size = 0x12000, scoped, tag = 'internal scratch']
  #allocation3 [shape = 's32[]', space=sflag, size = 0x4, offset = 0, fixed_abs, tag = 'sflag constant byte address 0x0 - dummy sync flag']
  #allocation4 [shape = 'u32[0]{0}', space=smem, size = 0, offset = 0, fixed_abs, tag = 'smem constant byte address 0x0 - null']
  %s0 = inlined_call_operand.hbm [shape: f32[2,4,16,16], index: 0, kind: input, shape index: {}]
  %s1 = inlined_call_operand.hbm [shape: f32[2,4,16,16], index: 1, kind: output, shape index: {}]
  %s2 = sld [smem:[#allocation0]]
  $region3: #{_forward_dma.1} parent=0
    _
  %s4 = ssub.s32 1, %s2
  %s5 = scalar_select 0, %s4, %s2
  $region2: #{_forward_dma.1} parent=0
    #allocation2 [shape = 's32[1]{0}', space=sflag, size = 0x4, scoped, tag = 'scoped memory for _forward_dma.1']
    %s7 = sshll.u32 1, 14
    %s8 = sxor.u32 4294967295, %s7
    %s11 = sshll.u32 3, 24
    %s12 = sxor.u32 4294967295, %s11
    %s13 = sand.u32 0, %s12
    %s15 = sor.u32 %s13, 0
    %18 = dma.general %s0, 2048, %s1, [#allocation2], [#allocation3], [#allocation4], %s15, 0
    %s19 = smul.u32 2, 4
    %s20 = smul.u32 %s19, 16
    %s21 = smul.u32 %s20, 1
    %s22 = sshll.u32 %s21, 4
    %23 = dma.done [#allocation2], %s22

// kernel: discriminator_forward_tiled.1
$region0: #{discriminator_forward_tiled.1}
  #allocation0 [shape = 'u32[]', space=smem, size = 0x4, offset = 0x4, fixed_abs, tag = 'smem constant byte address 0x4 - core index']
  #allocation1 [shape = 'u32[144,128]{1,0:T(1,128)}', space=vmem, size = 0x12000, scoped, tag = 'internal scratch']
  %s0 = inlined_call_operand.vmem [shape: f32[1,2048], index: 0, kind: input, shape index: {}]
  %s1 = inlined_call_operand.vmem [shape: f32[1,2048], index: 1, kind: output, shape index: {}]
  %s2 = sld [smem:[#allocation0]]
  $region14: #{discriminator_forward_tiled.1} parent=0
    _
  %s4 = ssub.s32 1, %s2
  %s5 = scalar_select 0, %s4, %s2
  // Predicated region
  $region2: #{discriminator_forward_tiled.1} parent=0 // pred_check
    _
  $region3: #{discriminator_forward_tiled.1} parent=0 // pred_check_branch
    %7 = sbr.rel (0) target = $region5
  $region4: #{discriminator_forward_tiled.1} parent=0 // pred_region
    _
  $region5: #{discriminator_forward_tiled.1} parent=0 // pred_fallthru
    _
  %v8 = vld [vmem:[%s0] sm:$0xff]
  %v9 = vld [vmem:[%s0 + $0x8] sm:$0xff]
  %10 = vst [vmem:[%s1] sm:$0xff] %v8
  %11 = vst [vmem:[%s1 + $0x8] sm:$0xff] %v9
  // Predicated region
  $region6: #{discriminator_forward_tiled.1} parent=0 // pred_check
    _
  $region7: #{discriminator_forward_tiled.1} parent=0 // pred_check_branch
    %13 = sbr.rel (0) target = $region9
  $region8: #{discriminator_forward_tiled.1} parent=0 // pred_region
    _
  $region9: #{discriminator_forward_tiled.1} parent=0 // pred_fallthru
    _
  // Predicated region
  $region10: #{discriminator_forward_tiled.1} parent=0 // pred_check
    _
  $region11: #{discriminator_forward_tiled.1} parent=0 // pred_check_branch
    %15 = sbr.rel (0) target = $region13
  $region12: #{discriminator_forward_tiled.1} parent=0 // pred_region
    _
  $region13: #{discriminator_forward_tiled.1} parent=0 // pred_fallthru
    _

</llo_original>
